<compile_context>
chip_gen: v7x
topology: tpu7x:2x2x1
jax: 0.10.0
libtpu: 0.0.40
codegen_flags: <defaults>
</compile_context>

<pallas_src>
import math

import jax
import jax.numpy as jnp
from jax.experimental import pallas as pl
from jax.experimental.pallas import tpu as pltpu


def _gat_kernel(alpha, n_nodes, f_out, block_b):
    """Pallas kernel closure with LeakyReLU slope / static sizes baked in."""

    def kernel(h_ref, mask_ref, wcat_ref, out_ref):
        # h_ref:    (block_b, N, F_in)
        # mask_ref: (block_b, N, N)      additive mask: 0 (edge) / -9e15 (no edge)
        # wcat_ref: (F_in, F_out + 2) == [W | W@a1 | W@a2]
        # out_ref:  (block_b, N, F_out)
        f_in = h_ref.shape[-1]

        # ---- single fused MXU pass: [Wh | Wh.a1 | Wh.a2] = h @ Wcat ----------
        h2 = h_ref[...].reshape(block_b * n_nodes, f_in)
        scores = jnp.dot(h2, wcat_ref[...], preferred_element_type=jnp.float32)
        Wh = scores[:, :f_out].reshape(block_b, n_nodes, f_out)
        wh1 = scores[:, f_out:f_out + 1].reshape(block_b, n_nodes, 1)
        wh2 = scores[:, f_out + 1:f_out + 2].reshape(block_b, n_nodes, 1)

        # ---- attention logits: leakyrelu(wh1_i + wh2_j) + additive mask ------
        e = wh1 + jnp.transpose(wh2, (0, 2, 1))          # (block_b, N, N)
        e = jnp.maximum(e, alpha * e)                    # LeakyReLU (0<alpha<1)
        logits = e + mask_ref[...]                       # -9e15 where no edge

        # ---- softmax over neighbors (dim=2) ----------------------------------
        m = jnp.max(logits, axis=-1, keepdims=True)
        p = jnp.exp(logits - m)
        att = p / jnp.sum(p, axis=-1, keepdims=True)

        # F.dropout(attention, p, training=False) -> identity (eval mode).
        # TODO(synk): training-mode dropout (stochastic mask via pltpu.prng_*)
        # intentionally omitted to keep the forward deterministic.

        # ---- aggregation + ELU (concat=True) ---------------------------------
        h_prime = jnp.einsum("bnm,bmo->bno", att, Wh,
                             preferred_element_type=jnp.float32)
        out = jnp.where(h_prime > 0, h_prime,
                        jnp.exp(jnp.minimum(h_prime, 0.0)) - 1.0)
        out_ref[...] = out.astype(out_ref.dtype)

    return kernel


def _pick_block_b(batch):
    """Largest divisor of `batch` leaving >= 2 grid steps (both v7x TCs busy)."""
    if batch <= 1:
        return 1
    best = 1
    for d in range(1, batch // 2 + 1):
        if batch % d == 0:
            best = d
    return best


def gat_forward(h, adj, W, a, *, alpha=0.2, block_b=None):
    """Pallas GAT layer forward (concat=True, eval-mode dropout)."""
    B, N, F_in = h.shape
    F_out = W.shape[1]
    if block_b is None:
        block_b = _pick_block_b(B)
    if B % block_b != 0:
        raise ValueError(f"block_b={block_b} must divide batch={B}")
    num_blocks = B // block_b

    a1 = a[:F_out, :]       # (F_out, 1)
    a2 = a[F_out:, :]       # (F_out, 1)
    # Fused weight: one MXU pass yields Wh, Wh@a1 and Wh@a2 simultaneously.
    Wcat = jnp.concatenate([W, W @ a1, W @ a2], axis=1).astype(jnp.float32)
    # Additive adjacency mask (exact PyTorch constant -9e15).
    mask = jnp.where(adj > 0, 0.0, -9e15).astype(jnp.float32)
    # TODO(synk): at realistic N, ship adjacency as int8 (4x less DMA) and tile
    # softmax + aggregation flash-style over neighbor tiles so the resident
    # (N, N) attention fits v7x's 64 MiB VMEM; unnecessary at toy sizes.

    flops = 2 * B * N * F_in * (F_out + 2) + 2 * B * N * N * F_out
    transcendentals = B * N * N + B * N * F_out
    bytes_accessed = 4 * (h.size + mask.size + Wcat.size + B * N * F_out)

    return pl.pallas_call(
        _gat_kernel(float(alpha), N, F_out, block_b),
        out_shape=jax.ShapeDtypeStruct((B, N, F_out), jnp.float32),
        grid_spec=pltpu.PrefetchScalarGridSpec(
            num_scalar_prefetch=0,
            grid=(num_blocks,),
            in_specs=[
                pl.BlockSpec((block_b, N, F_in), lambda g: (g, 0, 0)),
                pl.BlockSpec((block_b, N, N), lambda g: (g, 0, 0)),
                pl.BlockSpec((F_in, F_out + 2), lambda g: (0, 0)),
            ],
            out_specs=pl.BlockSpec((block_b, N, F_out), lambda g: (g, 0, 0)),
        ),
        compiler_params=pltpu.CompilerParams(
            dimension_semantics=("parallel",)),
        cost_estimate=pl.CostEstimate(
            flops=flops,
            transcendentals=transcendentals,
            bytes_accessed=bytes_accessed),
    )(h, mask, Wcat)


def _xavier_uniform(key, shape, gain):
    fan_in, fan_out = shape[0], shape[1]
    limit = gain * math.sqrt(6.0 / (fan_in + fan_out))
    return jax.random.uniform(key, shape, jnp.float32, -limit, limit)


def gat_reference(h, adj, W, a, *, alpha=0.2):
    """Pure-JAX reference mirroring the PyTorch forward (eval mode)."""
    F_out = W.shape[1]
    Wh = jnp.einsum("bnf,fo->bno", h, W)
    Wh1 = jnp.einsum("bno,ok->bnk", Wh, a[:F_out, :])
    Wh2 = jnp.einsum("bno,ok->bnk", Wh, a[F_out:, :])
    e = Wh1 + jnp.transpose(Wh2, (0, 2, 1))
    e = jnp.where(e > 0, e, alpha * e)
    att = jnp.where(adj > 0, e, -9e15)
    att = jax.nn.softmax(att, axis=2)
    h_prime = jnp.einsum("bnm,bmo->bno", att, Wh)
    return jnp.where(h_prime > 0, h_prime, jnp.exp(h_prime) - 1.0)


if __name__ == "__main__":
    # Module hyper-params
    in_features, out_features = 32, 32
    alpha, dropout = 0.2, 0.1   # dropout unused (eval mode)
    B, N = 2, 16                # batch of graphs, nodes per graph

    key = jax.random.PRNGKey(0)
    k_w, k_a, k_h, k_adj = jax.random.split(key, 4)

    # Deterministic xavier_uniform_(gain=1.414) parameter init.
    W = _xavier_uniform(k_w, (in_features, out_features), gain=1.414)
    a = _xavier_uniform(k_a, (2 * out_features, 1), gain=1.414)

    # Example inputs.
    h = jax.random.normal(k_h, (B, N, in_features), jnp.float32)
    adj = (jax.random.uniform(k_adj, (B, N, N)) > 0.5).astype(jnp.float32)
    # Self-loops so every row has at least one valid neighbor.
    adj = jnp.maximum(adj, jnp.eye(N, dtype=jnp.float32)[None])

    out = gat_forward(h, adj, W, a, alpha=alpha)
    out = jax.block_until_ready(out)

    ref = gat_reference(h, adj, W, a, alpha=alpha)
    assert out.shape == (B, N, out_features)
    assert jnp.allclose(out, ref, atol=1e-4, rtol=1e-4), "mismatch vs reference"

    print("KERNEL_OK")
</pallas_src>

<mosaic_0001>
module attributes {stable_mosaic.version = 11 : i64} {
  func.func @kernel(%arg0: i32, %arg1: memref<1x16x32xf32, #tpu.memory_space<vmem>>, %arg2: memref<1x16x16xf32, #tpu.memory_space<vmem>>, %arg3: memref<32x34xf32, #tpu.memory_space<vmem>>, %arg4: memref<1x16x32xf32, #tpu.memory_space<vmem>>) attributes {dimension_semantics = [#tpu.dimension_semantics<parallel>], iteration_bounds = array<i64: 2>, scalar_prefetch = 0 : i64, scratch_operands = 0 : i64, tpu.core_type = #tpu.core_type<tc>, window_params = [{transform_indices = @transform_0, window_bounds = array<i64: 1, 16, 32>}, {transform_indices = @transform_1, window_bounds = array<i64: 1, 16, 16>}, {pipeline_mode = #tpu.pipeline_mode<synchronous>, transform_indices = @transform_2, window_bounds = array<i64: 32, 34>}, {transform_indices = @transform_3, window_bounds = array<i64: 1, 16, 32>}]} {
    %c0 = arith.constant 0 : index
    %c0_0 = arith.constant 0 : index
    %c0_1 = arith.constant 0 : index
    %0 = vector.load %arg1[%c0, %c0_0, %c0_1] : memref<1x16x32xf32, #tpu.memory_space<vmem>>, vector<1x16x32xf32>
    %1 = vector.shape_cast %0 : vector<1x16x32xf32> to vector<16x32xf32>
    %c0_2 = arith.constant 0 : index
    %c0_3 = arith.constant 0 : index
    %2 = vector.load %arg3[%c0_2, %c0_3] : memref<32x34xf32, #tpu.memory_space<vmem>>, vector<32x34xf32>
    %cst = arith.constant dense<0.000000e+00> : vector<16x34xf32>
    %3 = tpu.matmul %1, %2, %cst {dimension_numbers = #tpu.dot_dimension_numbers<[1], [0], [0], [1], [0, 0, 1, 1], [], []>} : vector<16x32xf32>, vector<32x34xf32>, vector<16x34xf32> -> vector<16x34xf32>
    %4 = vector.extract_strided_slice %3 {offsets = [0, 0], sizes = [16, 32], strides = [1, 1]} : vector<16x34xf32> to vector<16x32xf32>
    %5 = vector.shape_cast %4 : vector<16x32xf32> to vector<1x16x32xf32>
    %6 = vector.extract_strided_slice %3 {offsets = [0, 32], sizes = [16, 1], strides = [1, 1]} : vector<16x34xf32> to vector<16x1xf32>
    %7 = vector.shape_cast %6 : vector<16x1xf32> to vector<1x16x1xf32>
    %8 = vector.extract_strided_slice %3 {offsets = [0, 33], sizes = [16, 1], strides = [1, 1]} : vector<16x34xf32> to vector<16x1xf32>
    %9 = vector.shape_cast %8 : vector<16x1xf32> to vector<1x16x1xf32>
    %10 = tpu.transpose %9, [0, 2, 1] : vector<1x16x1xf32> -> vector<1x1x16xf32>
    %11 = vector.broadcast %7 : vector<1x16x1xf32> to vector<1x16x16xf32>
    %12 = vector.broadcast %10 : vector<1x1x16xf32> to vector<1x16x16xf32>
    %13 = arith.addf %11, %12 : vector<1x16x16xf32>
    %cst_4 = arith.constant 2.000000e-01 : f32
    %14 = vector.broadcast %cst_4 : f32 to vector<1x16x16xf32>
    %15 = arith.mulf %14, %13 : vector<1x16x16xf32>
    %16 = arith.maximumf %13, %15 : vector<1x16x16xf32>
    %c0_5 = arith.constant 0 : index
    %c0_6 = arith.constant 0 : index
    %c0_7 = arith.constant 0 : index
    %17 = vector.load %arg2[%c0_5, %c0_6, %c0_7] : memref<1x16x16xf32, #tpu.memory_space<vmem>>, vector<1x16x16xf32>
    %18 = arith.addf %16, %17 : vector<1x16x16xf32>
    %cst_8 = arith.constant dense<0xFF800000> : vector<1x16xf32>
    %19 = vector.multi_reduction <maximumf>, %18, %cst_8 [2] : vector<1x16x16xf32> to vector<1x16xf32>
    %20 = vector.shape_cast %19 : vector<1x16xf32> to vector<1x16x1xf32>
    %21 = vector.broadcast %20 : vector<1x16x1xf32> to vector<1x16x16xf32>
    %22 = arith.subf %18, %21 : vector<1x16x16xf32>
    %23 = math.exp %22 : vector<1x16x16xf32>
    %cst_9 = arith.constant dense<0.000000e+00> : vector<1x16xf32>
    %24 = vector.multi_reduction <add>, %23, %cst_9 [2] : vector<1x16x16xf32> to vector<1x16xf32>
    %25 = vector.shape_cast %24 : vector<1x16xf32> to vector<1x16x1xf32>
    %26 = vector.broadcast %25 : vector<1x16x1xf32> to vector<1x16x16xf32>
    %27 = arith.divf %23, %26 : vector<1x16x16xf32>
    "tpu.trace_start"() <{level = 10 : i32, message = "bnm,bmo->bno"}> : () -> ()
    %cst_10 = arith.constant dense<0.000000e+00> : vector<1x16x32xf32>
    %28 = tpu.matmul %27, %5, %cst_10 {dimension_numbers = #tpu.dot_dimension_numbers<[2], [1], [1], [2], [0, 0, 0, 1, 1, 2], [0], [0]>} : vector<1x16x16xf32>, vector<1x16x32xf32>, vector<1x16x32xf32> -> vector<1x16x32xf32>
    %cst_11 = arith.constant 0.000000e+00 : f32
    "tpu.trace_stop"() : () -> ()
    %29 = vector.broadcast %cst_11 : f32 to vector<1x16x32xf32>
    %30 = arith.cmpf ogt, %28, %29 : vector<1x16x32xf32>
    %cst_12 = arith.constant 0.000000e+00 : f32
    %31 = vector.broadcast %cst_12 : f32 to vector<1x16x32xf32>
    %32 = arith.minimumf %28, %31 : vector<1x16x32xf32>
    %33 = math.exp %32 : vector<1x16x32xf32>
    %cst_13 = arith.constant 1.000000e+00 : f32
    %34 = vector.broadcast %cst_13 : f32 to vector<1x16x32xf32>
    %35 = arith.subf %33, %34 : vector<1x16x32xf32>
    %36 = arith.select %30, %28, %35 : vector<1x16x32xi1>, vector<1x16x32xf32>
    %c0_14 = arith.constant 0 : index
    %c0_15 = arith.constant 0 : index
    %c0_16 = arith.constant 0 : index
    %37 = vector.load %arg4[%c0_14, %c0_15, %c0_16] : memref<1x16x32xf32, #tpu.memory_space<vmem>>, vector<1x16x32xf32>
    tpu.vector_store %arg4[%c0_14, %c0_15, %c0_16], %36 {strides = array<i32>} : memref<1x16x32xf32, #tpu.memory_space<vmem>>, vector<1x16x32xf32>,
    return
  }
  func.func @transform_0(%arg0: i32) -> (i32, i32, i32) {
    %c0_i32 = arith.constant 0 : i32
    %c0_i32_0 = arith.constant 0 : i32
    %c0_i32_1 = arith.constant 0 : i32
    return %arg0, %c0_i32, %c0_i32_0 : i32, i32, i32
  }
  func.func @transform_1(%arg0: i32) -> (i32, i32, i32) {
    %c0_i32 = arith.constant 0 : i32
    %c0_i32_0 = arith.constant 0 : i32
    %c0_i32_1 = arith.constant 0 : i32
    return %arg0, %c0_i32, %c0_i32_0 : i32, i32, i32
  }
  func.func @transform_2(%arg0: i32) -> (i32, i32) {
    %c0_i32 = arith.constant 0 : i32
    %c0_i32_0 = arith.constant 0 : i32
    %c0_i32_1 = arith.constant 0 : i32
    return %c0_i32, %c0_i32_0 : i32, i32
  }
  func.func @transform_3(%arg0: i32) -> (i32, i32, i32) {
    %c0_i32 = arith.constant 0 : i32
    %c0_i32_0 = arith.constant 0 : i32
    %c0_i32_1 = arith.constant 0 : i32
    return %arg0, %c0_i32, %c0_i32_0 : i32, i32, i32
  }
}

</mosaic_0001>

<llo_original>
// kernel: tpu_custom_call.1
$region0: #{tpu_custom_call.1}
  #allocation0 [shape = 'u32[]', space=smem, size = 0x4, offset = 0x4, fixed_abs, tag = 'smem constant byte address 0x4 - core index']
  #allocation1 [shape = 'u32[144,128]{1,0:T(1,128)}', space=vmem, size = 0x12000, scoped, tag = 'internal scratch']
  %s0 = inlined_call_operand.hbm [shape: f32[2,16,32], index: 0, kind: input, shape index: {}]
  %s1 = inlined_call_operand.hbm [shape: f32[2,16,16], index: 1, kind: input, shape index: {}]
  %s2 = inlined_call_operand.hbm [shape: f32[32,34], index: 2, kind: input, shape index: {}]
  %s3 = inlined_call_operand.hbm [shape: f32[2,16,32], index: 3, kind: output, shape index: {}]
  %s4 = sld [smem:[#allocation0]]
  $region57: #{tpu_custom_call.1} parent=0
    _
  %s6 = ssub.s32 1, %s4
  %s7 = scalar_select 0, %s6, %s4
  $region1: #{tpu_custom_call.1} parent=0
    #allocation2 [shape = 'u8[16384]{0}', space=vmem, size = 0x4000, scoped, tag = 'input window, operand 0']
    #allocation3 [shape = 's32[2]{0}', space=sflag, size = 0x8, scoped, tag = 'scoped memory for tpu_custom_call.1']
    #allocation4 [shape = 's32[2]{0}', space=sflag, size = 0x8, scoped, tag = 'scoped memory for tpu_custom_call.1']
    #allocation5 [shape = 'u8[16384]{0}', space=vmem, size = 0x4000, scoped, tag = 'input window, operand 1']
    #allocation6 [shape = 's32[2]{0}', space=sflag, size = 0x8, scoped, tag = 'scoped memory for tpu_custom_call.1']
    #allocation7 [shape = 'u8[16384]{0}', space=vmem, size = 0x4000, scoped, tag = 'input window, operand 2, single buffered']
    #allocation8 [shape = 'u8[16384]{0}', space=vmem, size = 0x4000, scoped, tag = 'output window, operand 0']
    %8 = vsyncpa [#allocation3], 0
    %s9 = scalar_lea.sflag [#allocation3], 1
    %10 = vsyncpa %s9, 0
    %11 = vsyncpa [#allocation6], 0
    %s12 = scalar_lea.sflag [#allocation6], 1
    %13 = vsyncpa %s12, 0
    %14 = vsyncpa [#allocation4], 0
    %s15 = scalar_lea.sflag [#allocation4], 1
    %16 = vsyncpa %s15, 0
    loop: start=0, step=1, limit=4
    $region2: #{tpu_custom_call.1} parent=1 // loop_pre_header
      _
    $region3: #{tpu_custom_call.1} parent=1 // loop_header
      %s18 = sphi 0, %s22
      %p19 = scmp.ge.s32.totalorder %s18, 4
      %s28 = sphi 0, %s30
      %s31 = sphi 0, %s28
      %s32 = sphi 0, %s31
      %s48 = sphi 0, %s32
      %s54 = sphi 0, %s56
      %s57 = sphi 0, %s54
      %s58 = sphi 0, %s57
      %s74 = sphi 0, %s58
      %s78 = sphi 0, %s78
      %s80 = sphi 0, %s78
      %s81 = sphi 0, %s80
      %s95 = sphi 0, %s81
      %s101 = sphi 0, %s103
      %s104 = sphi 0, %s101
      %s105 = sphi 0, %s104
      %s121 = sphi 0, %s105
    $region4: #{tpu_custom_call.1} parent=1 // loop_header_branch
      %21 = sbr.rel (%p19) target = $region8
    $region5: #{tpu_custom_call.1} parent=1 // loop_body
      %s23 = ssub.s32 %s18, 1
      %s24 = ssub.s32 %s18, 2
      %s25 = sadd.s32 %s18, 1
      %s26 = ssub.s32 %s18, %s25
      %p27 = scmp.eq.s32.totalorder %s26, 0
      %s29 = sadd.s32 %s28, 1
      %s30 = scalar_select %p27, %s28, %s29
      %p33 = pneg %p27
      %p34 = scmp.eq.s32.totalorder %s18, 1
      %p35 = por %p33, %p34
      %p36 = scmp.ne.s32.totalorder %s28, %s31
      %p37 = scmp.eq.s32.totalorder %s18, 0
      %p38 = por %p36, %p37
      %p39 = scmp.ne.s32.totalorder %s28, %s31
      %p40 = scmp.eq.s32.totalorder %s23, 1
      %p41 = por %p39, %p40
      %p42 = scmp.ne.s32.totalorder %s31, %s32
      %p43 = scmp.eq.s32.totalorder %s23, 0
      %p44 = por %p42, %p43
      %p45 = scmp.ne.s32.totalorder %s31, %s32
      %p46 = scmp.eq.s32.totalorder %s24, 1
      %p47 = por %p45, %p46
      %p49 = scmp.ne.s32.totalorder %s32, %s48
      %p50 = scmp.eq.s32.totalorder %s24, 0
      %p51 = por %p49, %p50
      %s52 = ssub.s32 %s18, %s25
      %p53 = scmp.eq.s32.totalorder %s52, 0
      %s55 = sadd.s32 %s54, 1
      %s56 = scalar_select %p53, %s54, %s55
      %p59 = pneg %p53
      %p60 = scmp.eq.s32.totalorder %s18, 1
      %p61 = por %p59, %p60
      %p62 = scmp.ne.s32.totalorder %s54, %s57
      %p63 = scmp.eq.s32.totalorder %s18, 0
      %p64 = por %p62, %p63
      %p65 = scmp.ne.s32.totalorder %s54, %s57
      %p66 = scmp.eq.s32.totalorder %s23, 1
      %p67 = por %p65, %p66
      %p68 = scmp.ne.s32.totalorder %s57, %s58
      %p69 = scmp.eq.s32.totalorder %s23, 0
      %p70 = por %p68, %p69
      %p71 = scmp.ne.s32.totalorder %s57, %s58
      %p72 = scmp.eq.s32.totalorder %s24, 1
      %p73 = por %p71, %p72
      %p75 = scmp.ne.s32.totalorder %s58, %s74
      %p76 = scmp.eq.s32.totalorder %s24, 0
      %p77 = por %p75, %p76
      %s79 = sadd.s32 %s78, 1
      %p82 = scmp.eq.s32.totalorder %s18, 1
      %p83 = scmp.ne.s32.totalorder %s78, %s80
      %p84 = scmp.eq.s32.totalorder %s18, 0
      %p85 = por %p83, %p84
      %p86 = scmp.ne.s32.totalorder %s78, %s80
      %p87 = scmp.eq.s32.totalorder %s23, 1
      %p88 = por %p86, %p87
      %p89 = scmp.ne.s32.totalorder %s80, %s81
      %p90 = scmp.eq.s32.totalorder %s23, 0
      %p91 = por %p89, %p90
      %p92 = scmp.ne.s32.totalorder %s80, %s81
      %p93 = scmp.eq.s32.totalorder %s24, 1
      %p94 = por %p92, %p93
      %p96 = scmp.ne.s32.totalorder %s81, %s95
      %p97 = scmp.eq.s32.totalorder %s24, 0
      %p98 = por %p96, %p97
      %s99 = ssub.s32 %s18, %s25
      %p100 = scmp.eq.s32.totalorder %s99, 0
      %s102 = sadd.s32 %s101, 1
      %s103 = scalar_select %p100, %s101, %s102
      %p106 = pneg %p100
      %p107 = scmp.eq.s32.totalorder %s18, 1
      %p108 = por %p106, %p107
      %p109 = scmp.ne.s32.totalorder %s101, %s104
      %p110 = scmp.eq.s32.totalorder %s18, 0
      %p111 = por %p109, %p110
      %p112 = scmp.ne.s32.totalorder %s101, %s104
      %p113 = scmp.eq.s32.totalorder %s23, 1
      %p114 = por %p112, %p113
      %p115 = scmp.ne.s32.totalorder %s104, %s105
      %p116 = scmp.eq.s32.totalorder %s23, 0
      %p117 = por %p115, %p116
      %p118 = scmp.ne.s32.totalorder %s104, %s105
      %p119 = scmp.eq.s32.totalorder %s24, 1
      %p120 = por %p118, %p119
      %p122 = scmp.ne.s32.totalorder %s105, %s121
      %p123 = scmp.eq.s32.totalorder %s24, 0
      %p124 = por %p122, %p123
      %p125 = scmp.le.s32.totalorder 1, %s18
      %p126 = scmp.lt.s32.totalorder %s18, 3
      %p127 = pnand %p125, %p126
      %p128 = pneg %p127
      // Predicated region
      $region9: #{tpu_custom_call.1} parent=5 // pred_check
        _
      $region10: #{tpu_custom_call.1} parent=5 // pred_check_branch
        %130 = sbr.rel (%p127) target = $region12
      $region11: #{tpu_custom_call.1} parent=5 // pred_region
        %s131 = ssub.s32 %s18, 1
        // Predicated region
        $region13: #{tpu_custom_call.1} parent=11 // pred_check
          %p132 = pneg %p91
        $region14: #{tpu_custom_call.1} parent=11 // pred_check_branch
          %134 = sbr.rel (%p132) target = $region16
        $region15: #{tpu_custom_call.1} parent=11 // pred_region
          %s136 = ssub.s32 512, 512
          %137 = vsyncadd [#allocation6], %s136
          %s138 = sshll.u32 [#allocation7], 4
          %s139 = int_to_ptr.vmem [resolvable:$true] %s138
          %144 = dma.hbm_to_vmem [thread:$0]  %s2, 512, %s139, [#allocation6], 128, 128, 8
        $region16: #{tpu_custom_call.1} parent=11 // pred_fallthru
          _
      $region12: #{tpu_custom_call.1} parent=5 // pred_fallthru
        _
      %p145 = scmp.lt.s32.totalorder %s18, 2
      // Predicated region
      $region17: #{tpu_custom_call.1} parent=5 // pred_check
        %p146 = pneg %p145
      $region18: #{tpu_custom_call.1} parent=5 // pred_check_branch
        %148 = sbr.rel (%p146) target = $region20
      $region19: #{tpu_custom_call.1} parent=5 // pred_region
        // Predicated region
        $region21: #{tpu_custom_call.1} parent=19 // pred_check
          %p149 = pneg %p38
        $region22: #{tpu_custom_call.1} parent=19 // pred_check_branch
          %151 = sbr.rel (%p149) target = $region24
        $region23: #{tpu_custom_call.1} parent=19 // pred_region
          %s152 = sand.u32 %s28, 1
          %s153 = scalar_lea.sflag [#allocation3], %s152
          %s154 = sand.u32 %s28, 1
          %s155 = smul.addr %s154, 16
          %s156 = scalar_lea.vmem [#allocation2], %s155
          %s158 = ssub.s32 256, 256
          %159 = vsyncadd %s153, %s158
          %s160 = smul.addr %s18, 2
          %s161 = smul.addr %s160, 128
          %s162 = scalar_lea.hbm %s0, %s161
          %s163 = sshll.u32 %s156, 4
          %s164 = int_to_ptr.vmem [resolvable:$true] %s163
          %169 = dma.hbm_to_vmem [thread:$0]  %s162, 256, %s164, %s153, 128, 128, 8
        $region24: #{tpu_custom_call.1} parent=19 // pred_fallthru
          _
        // Predicated region
        $region25: #{tpu_custom_call.1} parent=19 // pred_check
          %p170 = pneg %p64
        $region26: #{tpu_custom_call.1} parent=19 // pred_check_branch
          %172 = sbr.rel (%p170) target = $region28
        $region27: #{tpu_custom_call.1} parent=19 // pred_region
          %s173 = sand.u32 %s18, 1
          %s174 = scalar_lea.sflag [#allocation6], %s173
          %s175 = sand.u32 %s54, 1
          %s176 = smul.addr %s175, 16
          %s177 = scalar_lea.vmem [#allocation5], %s176
          %s179 = ssub.s32 256, 256
          %180 = vsyncadd %s174, %s179
          %s181 = smul.addr %s18, 2
          %s182 = smul.addr %s181, 128
          %s183 = scalar_lea.hbm %s1, %s182
          %s184 = sshll.u32 %s177, 4
          %s185 = int_to_ptr.vmem [resolvable:$true] %s184
          %190 = dma.hbm_to_vmem [thread:$0]  %s183, 256, %s185, %s174, 128, 128, 8
        $region28: #{tpu_custom_call.1} parent=19 // pred_fallthru
          _
      $region20: #{tpu_custom_call.1} parent=5 // pred_fallthru
        _
      %p191 = scmp.le.s32.totalorder 1, %s18
      %p192 = scmp.lt.s32.totalorder %s18, 3
      %p193 = pnand %p191, %p192
      %p194 = pneg %p193
      // Predicated region
      $region29: #{tpu_custom_call.1} parent=5 // pred_check
        _
      $region30: #{tpu_custom_call.1} parent=5 // pred_check_branch
        %196 = sbr.rel (%p193) target = $region32
      $region31: #{tpu_custom_call.1} parent=5 // pred_region
        %s197 = ssub.s32 %s18, 1
        %s198 = sand.u32 %s31, 1
        %s199 = scalar_lea.sflag [#allocation3], %s198
        %s200 = sand.u32 %s31, 1
        %s201 = smul.addr %s200, 16
        %s202 = scalar_lea.vmem [#allocation2], %s201
        // Predicated region
        $region33: #{tpu_custom_call.1} parent=31 // pred_check
          %p203 = pneg %p44
        $region34: #{tpu_custom_call.1} parent=31 // pred_check_branch
          %205 = sbr.rel (%p203) target = $region36
        $region35: #{tpu_custom_call.1} parent=31 // pred_region
          %206 = dma.done %s199, 256
        $region36: #{tpu_custom_call.1} parent=31 // pred_fallthru
          _
        %s207 = sand.u32 %s23, 1
        %s208 = scalar_lea.sflag [#allocation6], %s207
        %s209 = sand.u32 %s57, 1
        %s210 = smul.addr %s209, 16
        %s211 = scalar_lea.vmem [#allocation5], %s210
        // Predicated region
        $region37: #{tpu_custom_call.1} parent=31 // pred_check
          %p212 = pneg %p70
        $region38: #{tpu_custom_call.1} parent=31 // pred_check_branch
          %214 = sbr.rel (%p212) target = $region40
        $region39: #{tpu_custom_call.1} parent=31 // pred_region
          %215 = dma.done %s208, 256
        $region40: #{tpu_custom_call.1} parent=31 // pred_fallthru
          _
        // Predicated region
        $region41: #{tpu_custom_call.1} parent=31 // pred_check
          %p216 = pneg %p91
        $region42: #{tpu_custom_call.1} parent=31 // pred_check_branch
          %218 = sbr.rel (%p216) target = $region44
        $region43: #{tpu_custom_call.1} parent=31 // pred_region
          %219 = dma.done [#allocation6], 512
        $region44: #{tpu_custom_call.1} parent=31 // pred_fallthru
          _
        %s220 = sand.u32 %s31, 1
        %s221 = scalar_lea.sflag [#allocation3], %s220
        %s222 = sand.u32 %s31, 1
        %s223 = smul.addr %s222, 16
        %s224 = scalar_lea.vmem [#allocation2], %s223
        %p225 = pneg %p44
        %p226 = pneg %p41
        %s227 = sand.u32 %s23, 1
        %s228 = scalar_lea.sflag [#allocation6], %s227
        %s229 = sand.u32 %s57, 1
        %s230 = smul.addr %s229, 16
        %s231 = scalar_lea.vmem [#allocation5], %s230
        %p232 = pneg %p70
        %p233 = pneg %p67
        %p234 = pneg %p91
        %p235 = pneg %p88
        %p236 = pneg %p117
        %p237 = pneg %p114
        %s238 = sand.u32 %s104, 1
        %s239 = scalar_lea.sflag [#allocation4], %s238
        %s240 = sand.u32 %s104, 1
        %s241 = smul.addr %s240, 16
        %s242 = scalar_lea.vmem [#allocation8], %s241
        %v243 = vld [vmem:[%s202] sm:$0xff]
        %v244 = vld [vmem:[%s202 + $0x8] sm:$0xff]
        %v245 = vld [vmem:[#allocation7] sm:$0xff]
        %v246 = vld [vmem:[#allocation7 + $0x8] sm:$0xff]
        %v247 = vld [vmem:[#allocation7 + $0x10] sm:$0xff]
        %v248 = vld [vmem:[#allocation7 + $0x18] sm:$0xff]
        %vm249 = vcmask 261120
        %v251 = vsel %vm249, %v243, 0
        %v254 = vsel %vm249, %v244, 0
        %256 = vmatprep.subr.mxu0 0.0
        %257 = vmatpush1.msra.mxu0 %v245
        %258 = vmatprep.subr.mxu0 0.0
        %259 = vmatpush1.msra.mxu0 %v246
        %260 = vmatprep.subr.mxu0 0.0
        %261 = vmatpush1.msra.mxu0 %v247
        %262 = vmatprep.subr.mxu0 0.0
        %263 = vmatpush1.msra.mxu0 %v248
        %264 = vmatprep.subr.mxu0 0.0
        %265 = vmatpush1.msra.mxu0 0.0
        %266 = vmatprep.subr.mxu0 0.0
        %267 = vmatpush1.msra.mxu0 0.0
        %268 = vmatprep.subr.mxu0 0.0
        %269 = vmatpush1.msra.mxu0 0.0
        %270 = vmatprep.subr.mxu0 0.0
        %271 = vmatpush1.msra.mxu0 0.0
        %272 = vmatprep.subr.mxu0 0.0
        %273 = vmatpush1.msra.mxu0 0.0
        %274 = vmatprep.subr.mxu0 0.0
        %275 = vmatpush1.msra.mxu0 0.0
        %276 = vmatprep.subr.mxu0 0.0
        %277 = vmatpush1.msra.mxu0 0.0
        %278 = vmatprep.subr.mxu0 0.0
        %279 = vmatpush1.msra.mxu0 0.0
        %280 = vmatprep.subr.mxu0 0.0
        %281 = vmatpush1.msra.mxu0 0.0
        %282 = vmatprep.subr.mxu0 0.0
        %283 = vmatpush1.msra.mxu0 0.0
        %284 = vmatprep.subr.mxu0 0.0
        %285 = vmatpush1.msra.mxu0 0.0
        %286 = vmatprep.subr.mxu0 0.0
        %287 = vmatpush1.msra.mxu0 0.0
        %288 = vmatprep.subr.mxu0 0.0
        %289 = vmatpush1.msra.mxu0 0.0
        %290 = vmatprep.subr.mxu0 0.0
        %291 = vmatpush1.msra.mxu0 0.0
        %292 = vmatprep.subr.mxu0 0.0
        %293 = vmatpush1.msra.mxu0 0.0
        %294 = vmatprep.subr.mxu0 0.0
        %295 = vmatpush1.msra.mxu0 0.0
        %296 = vmatprep.subr.mxu0 0.0
        %297 = vmatpush1.msra.mxu0 0.0
        %298 = vmatprep.subr.mxu0 0.0
        %299 = vmatpush1.msra.mxu0 0.0
        %300 = vmatprep.subr.mxu0 0.0
        %301 = vmatpush1.msra.mxu0 0.0
        %302 = vmatprep.subr.mxu0 0.0
        %303 = vmatpush1.msra.mxu0 0.0
        %304 = vmatprep.subr.mxu0 0.0
        %305 = vmatpush1.msra.mxu0 0.0
        %306 = vmatprep.subr.mxu0 0.0
        %307 = vmatpush1.msra.mxu0 0.0
        %308 = vmatprep.subr.mxu0 0.0
        %309 = vmatpush1.msra.mxu0 0.0
        %310 = vmatprep.subr.mxu0 0.0
        %311 = vmatpush1.msra.mxu0 0.0
        %312 = vmatprep.subr.mxu0 0.0
        %313 = vmatpush1.msra.mxu0 0.0
        %314 = vmatprep.subr.mxu0 0.0
        %315 = vmatpush1.msra.mxu0 0.0
        %316 = vmatprep.subr.mxu0 0.0
        %317 = vmatpush1.msra.mxu0 0.0
        %318 = vmatprep.subr.mxu0 0.0
        %319 = vmatpush1.msra.mxu0 0.0
        %320 = vmatprep.mubr.f32.mxu0 0.0
        %321 = vmatmul.mubr.f32.gmra.mrb[0].mxu0 %v251
        %v322 = vpop.f32.mrb[0].mxu0
        %v323 = vadd.f32 0.0, %v322
        %v324 = vpop.f32.mrb[0].mxu0
        %325 = vmatprep.mubr.f32.mxu0 0.0
        %326 = vmatmul.mubr.f32.gmra.mrb[0].mxu0 %v254
        %v327 = vpop.f32.mrb[0].mxu0
        %v328 = vadd.f32 0.0, %v327
        %v329 = vpop.f32.mrb[0].mxu0
        %330 = vdwg.mxu0
        %333 = vrot.lane.b32.xlu0 %v323, 95
        %v334 = vpop.permute.xlu0 %333
        %335 = vrot.lane.b32.xlu0 %v328, 95
        %v336 = vpop.permute.xlu0 %335
        %339 = vxpose.xlu0.b32.start [1/16] %v334, 128
        %340 = vxpose.xlu0.b32.cont [2/16] %v336, 128
        %341 = vxpose.xlu0.b32.cont [3/16] 0.0, 128
        %342 = vxpose.xlu0.b32.cont [4/16] 0.0, 128
        %343 = vxpose.xlu0.b32.cont [5/16] 0.0, 128
        %344 = vxpose.xlu0.b32.cont [6/16] 0.0, 128
        %345 = vxpose.xlu0.b32.cont [7/16] 0.0, 128
        %346 = vxpose.xlu0.b32.cont [8/16] 0.0, 128
        %347 = vxpose.xlu0.b32.cont [9/16] 0.0, 128
        %348 = vxpose.xlu0.b32.cont [10/16] 0.0, 128
        %349 = vxpose.xlu0.b32.cont [11/16] 0.0, 128
        %350 = vxpose.xlu0.b32.cont [12/16] 0.0, 128
        %351 = vxpose.xlu0.b32.cont [13/16] 0.0, 128
        %352 = vxpose.xlu0.b32.cont [14/16] 0.0, 128
        %353 = vxpose.xlu0.b32.cont [15/16] 0.0, 128
        %354 = vxpose.xlu0.b32.end [16/16] 0.0, 128
        %v355 = vpop.trf.xlu0
        %v356 = vpop.trf.xlu0
        %v357 = vpop.trf.xlu0
        %v358 = vpop.trf.xlu0
        %v359 = vpop.trf.xlu0
        %v360 = vpop.trf.xlu0
        %v361 = vpop.trf.xlu0
        %v362 = vpop.trf.xlu0
        %v363 = vpop.trf.xlu0
        %v364 = vpop.trf.xlu0
        %v365 = vpop.trf.xlu0
        %v366 = vpop.trf.xlu0
        %v367 = vpop.trf.xlu0
        %v368 = vpop.trf.xlu0
        %v369 = vpop.trf.xlu0
        %v370 = vpop.trf.xlu0
        %371 = vset.pattern.permute.xlu0 32
        %372 = vperm.xlu0 %371, %v323
        %v373 = vpop.permute.xlu0 %372
        %375 = vset.pattern.permute.xlu0 32
        %376 = vperm.xlu0 %375, %v328
        %v377 = vpop.permute.xlu0 %376
        %v379 = vlaneseq
        %v380 = vshrl.u32 %v379, 7
        %v381 = vsub.s32 0, %v380
        %v382 = vrot.slane %v355, %v381
        %v383 = vadd.f32 %v373, %v382
        %v384 = vadd.f32 %v377, %v382
        %v385 = vmul.f32 %v383, 0.2
        %v386 = vmul.f32 %v384, 0.2
        %v387 = vmax.f32 %v383, %v385
        %v388 = vmax.f32 %v384, %v386
        %v389 = vld [vmem:[%s211] sm:$0xff]
        %v390 = vld [vmem:[%s211 + $0x8] sm:$0xff]
        %v391 = vadd.f32 %v387, %v389
        %v392 = vadd.f32 %v388, %v390
        %vm393 = vcmask 130048
        %v394 = vsel %vm393, %v391, -inf
        %395 = vmax.xlane.f32.xlu0 %v394
        %v396 = vpop.xlane.xlu0 %395
        %v397 = vsel %vm393, %v392, -inf
        %398 = vmax.xlane.f32.xlu0 %v397
        %v399 = vpop.xlane.xlu0 %398
        %v400 = vsub.f32 %v391, %v396
        %v401 = vsub.f32 %v392, %v399
        %v402 = vmul.f32 %v400, 1.442695
        %v403 = vpow.pop %v402
        %v404 = vmul.f32 %v401, 1.442695
        %v405 = vpow.pop %v404
        %v406 = vsel %vm393, %v403, 0.0
        %407 = vadd.xlane.f32.xlu0 %v406
        %v408 = vpop.xlane.xlu0 %407
        %v409 = vsel %vm393, %v405, 0.0
        %410 = vadd.xlane.f32.xlu0 %v409
        %v411 = vpop.xlane.xlu0 %410
        %v412 = vrcp.pop %v408
        %v413 = vmul.f32 %v403, %v412
        %v414 = vrcp.pop %v411
        %v415 = vmul.f32 %v405, %v414
        %v417 = vsel %vm393, %v413, 0
        %v420 = vsel %vm393, %v415, 0
        %422 = vmatprep.subr.mxu0 0.0
        %423 = vmatpush1.msra.mxu0 %v323
        %424 = vmatprep.subr.mxu0 0.0
        %425 = vmatpush1.msra.mxu0 %v328
        %426 = vmatprep.subr.mxu0 0.0
        %427 = vmatpush1.msra.mxu0 0.0
        %428 = vmatprep.subr.mxu0 0.0
        %429 = vmatpush1.msra.mxu0 0.0
        %430 = vmatprep.subr.mxu0 0.0
        %431 = vmatpush1.msra.mxu0 0.0
        %432 = vmatprep.subr.mxu0 0.0
        %433 = vmatpush1.msra.mxu0 0.0
        %434 = vmatprep.subr.mxu0 0.0
        %435 = vmatpush1.msra.mxu0 0.0
        %436 = vmatprep.subr.mxu0 0.0
        %437 = vmatpush1.msra.mxu0 0.0
        %438 = vmatprep.subr.mxu0 0.0
        %439 = vmatpush1.msra.mxu0 0.0
        %440 = vmatprep.subr.mxu0 0.0
        %441 = vmatpush1.msra.mxu0 0.0
        %442 = vmatprep.subr.mxu0 0.0
        %443 = vmatpush1.msra.mxu0 0.0
        %444 = vmatprep.subr.mxu0 0.0
        %445 = vmatpush1.msra.mxu0 0.0
        %446 = vmatprep.subr.mxu0 0.0
        %447 = vmatpush1.msra.mxu0 0.0
        %448 = vmatprep.subr.mxu0 0.0
        %449 = vmatpush1.msra.mxu0 0.0
        %450 = vmatprep.subr.mxu0 0.0
        %451 = vmatpush1.msra.mxu0 0.0
        %452 = vmatprep.subr.mxu0 0.0
        %453 = vmatpush1.msra.mxu0 0.0
        %454 = vmatprep.subr.mxu0 0.0
        %455 = vmatpush1.msra.mxu0 0.0
        %456 = vmatprep.subr.mxu0 0.0
        %457 = vmatpush1.msra.mxu0 0.0
        %458 = vmatprep.subr.mxu0 0.0
        %459 = vmatpush1.msra.mxu0 0.0
        %460 = vmatprep.subr.mxu0 0.0
        %461 = vmatpush1.msra.mxu0 0.0
        %462 = vmatprep.subr.mxu0 0.0
        %463 = vmatpush1.msra.mxu0 0.0
        %464 = vmatprep.subr.mxu0 0.0
        %465 = vmatpush1.msra.mxu0 0.0
        %466 = vmatprep.subr.mxu0 0.0
        %467 = vmatpush1.msra.mxu0 0.0
        %468 = vmatprep.subr.mxu0 0.0
        %469 = vmatpush1.msra.mxu0 0.0
        %470 = vmatprep.subr.mxu0 0.0
        %471 = vmatpush1.msra.mxu0 0.0
        %472 = vmatprep.subr.mxu0 0.0
        %473 = vmatpush1.msra.mxu0 0.0
        %474 = vmatprep.subr.mxu0 0.0
        %475 = vmatpush1.msra.mxu0 0.0
        %476 = vmatprep.subr.mxu0 0.0
        %477 = vmatpush1.msra.mxu0 0.0
        %478 = vmatprep.subr.mxu0 0.0
        %479 = vmatpush1.msra.mxu0 0.0
        %480 = vmatprep.subr.mxu0 0.0
        %481 = vmatpush1.msra.mxu0 0.0
        %482 = vmatprep.subr.mxu0 0.0
        %483 = vmatpush1.msra.mxu0 0.0
        %484 = vmatprep.subr.mxu0 0.0
        %485 = vmatpush1.msra.mxu0 0.0
        %486 = vmatprep.mubr.f32.mxu0 0.0
        %487 = vmatmul.mubr.f32.gmra.mrb[0].mxu0 %v417
        %v488 = vpop.f32.mrb[0].mxu0
        %v489 = vadd.f32 0.0, %v488
        %v490 = vpop.f32.mrb[0].mxu0
        %491 = vmatprep.mubr.f32.mxu0 0.0
        %492 = vmatmul.mubr.f32.gmra.mrb[0].mxu0 %v420
        %v493 = vpop.f32.mrb[0].mxu0
        %v494 = vadd.f32 0.0, %v493
        %v495 = vpop.f32.mrb[0].mxu0
        %496 = vdwg.mxu0
        %vm497 = vcmp.gt.f32.partialorder %v489, 0.0
        %vm498 = vcmp.gt.f32.partialorder %v494, 0.0
        %v499 = vmin.f32 %v489, 0.0
        %v500 = vmin.f32 %v494, 0.0
        %v501 = vmul.f32 %v499, 1.442695
        %v502 = vpow.pop %v501
        %v503 = vmul.f32 %v500, 1.442695
        %v504 = vpow.pop %v503
        %v505 = vsub.f32 %v502, 1.0
        %v506 = vsub.f32 %v504, 1.0
        %v507 = vsel %vm497, %v489, %v505
        %v508 = vsel %vm498, %v494, %v506
        %509 = vst.msk [vmem:[%s242] sm:$0xff] %vm249, %v507
        %510 = vst.msk [vmem:[%s242 + $0x8] sm:$0xff] %vm249, %v508
        %s511 = sand.u32 %s104, 1
        %s512 = scalar_lea.sflag [#allocation4], %s511
        %s513 = sand.u32 %s104, 1
        %s514 = smul.addr %s513, 16
        %s515 = scalar_lea.vmem [#allocation8], %s514
        // Predicated region
        $region45: #{tpu_custom_call.1} parent=31 // pred_check
          %p516 = pneg %p114
        $region46: #{tpu_custom_call.1} parent=31 // pred_check_branch
          %518 = sbr.rel (%p516) target = $region48
        $region47: #{tpu_custom_call.1} parent=31 // pred_region
          %s520 = ssub.s32 256, 256
          %521 = vsyncadd %s512, %s520
          %s522 = smul.addr %s23, 2
          %s523 = smul.addr %s522, 128
          %s524 = scalar_lea.hbm %s3, %s523
          %s525 = sshll.u32 %s515, 4
          %s526 = int_to_ptr.vmem [resolvable:$true] %s525
          %531 = dma.vmem_to_hbm [thread:$0]  %s526, 256, %s524, %s512, 128, 128, 8
        $region48: #{tpu_custom_call.1} parent=31 // pred_fallthru
          _
      $region32: #{tpu_custom_call.1} parent=5 // pred_fallthru
        _
      %p532 = scmp.le.s32.totalorder 2, %s18
      // Predicated region
      $region49: #{tpu_custom_call.1} parent=5 // pred_check
        %p533 = pneg %p532
      $region50: #{tpu_custom_call.1} parent=5 // pred_check_branch
        %535 = sbr.rel (%p533) target = $region52
      $region51: #{tpu_custom_call.1} parent=5 // pred_region
        %s536 = ssub.s32 %s18, 2
        // Predicated region
        $region53: #{tpu_custom_call.1} parent=51 // pred_check
          %p537 = pneg %p120
        $region54: #{tpu_custom_call.1} parent=51 // pred_check_branch
          %539 = sbr.rel (%p537) target = $region56
        $region55: #{tpu_custom_call.1} parent=51 // pred_region
          %s540 = sand.u32 %s105, 1
          %s541 = scalar_lea.sflag [#allocation4], %s540
          %s542 = sand.u32 %s105, 1
          %s543 = smul.addr %s542, 16
          %s544 = scalar_lea.vmem [#allocation8], %s543
          %545 = dma.done %s541, 256
        $region56: #{tpu_custom_call.1} parent=51 // pred_fallthru
          _
      $region52: #{tpu_custom_call.1} parent=5 // pred_fallthru
        _
    $region6: #{tpu_custom_call.1} parent=1 // loop_footer
      %s22 = sadd.s32 1, %s18
    $region7: #{tpu_custom_call.1} parent=1 // loop_footer_branch
      %17 = sbr.rel target = $region3
    $region8: #{tpu_custom_call.1} parent=1 // loop_exit
      _
    %546 = vsyncpa [#allocation3], 1
    %s547 = scalar_lea.sflag [#allocation3], 1
    %548 = vsyncpa %s547, 1
    %549 = vsyncpa [#allocation6], 1
    %s550 = scalar_lea.sflag [#allocation6], 1
    %551 = vsyncpa %s550, 1
    %552 = vsyncpa [#allocation4], 1
    %s553 = scalar_lea.sflag [#allocation4], 1
    %554 = vsyncpa %s553, 1

</llo_original>
